<compile_context>
chip_gen: v5e
topology: v5e:2x2
jax: 0.10.0
libtpu: 0.0.40
codegen_flags: <defaults>
</compile_context>

<pallas_src>
import math

import jax
import jax.numpy as jnp
from jax.experimental import pallas as pl
from jax.experimental.pallas import tpu as pltpu


def _round_up(a: int, b: int) -> int:
    return (a + b - 1) // b * b


def _sublane(dtype) -> int:
    # Minimum sublane tile per dtype width (f32: 8, bf16: 16, int8/fp8: 32).
    return {4: 8, 2: 16, 1: 32}[jnp.dtype(dtype).itemsize]


# ---------------------------------------------------------------------------
# Kernel A: weight-stationary (K collapsed into a single tile).
#   grid = (N_tiles, M_tiles); W block index depends only on the outer axis,
#   so the weight tile is not re-DMA'd while x tiles stream over M.
# ---------------------------------------------------------------------------
def _linear_kernel_wstationary(x_ref, w_ref, b_ref, o_ref):
    acc = jnp.dot(x_ref[...], w_ref[...], preferred_element_type=jnp.float32)
    o_ref[...] = (acc + b_ref[...].astype(jnp.float32)).astype(o_ref.dtype)


# ---------------------------------------------------------------------------
# Kernel B: K-split reduction with f32 VMEM accumulator (bias folded at k==0).
#   grid = (M_tiles, N_tiles, K_tiles), K innermost.
# ---------------------------------------------------------------------------
def _linear_kernel_ksplit(x_ref, w_ref, b_ref, o_ref, acc_ref):
    k = pl.program_id(2)

    @pl.when(k == 0)
    def _():
        acc_ref[...] = jnp.broadcast_to(
            b_ref[...].astype(jnp.float32), acc_ref.shape
        )

    acc_ref[...] += jnp.dot(
        x_ref[...], w_ref[...], preferred_element_type=jnp.float32
    )

    @pl.when(k == pl.num_programs(2) - 1)
    def _():
        o_ref[...] = acc_ref[...].astype(o_ref.dtype)


def make_linear_net(weight, bias=None, *, tm=512, tn=512, tk=1024,
                    compute_dtype=jnp.bfloat16):
    """One-time setup: pre-transpose / pad / cast the weight, return a jitted
    forward closure computing y = x @ weight.T + bias."""
    out_features, in_features = weight.shape
    cdt = jnp.dtype(compute_dtype)
    citem = cdt.itemsize
    sub = _sublane(compute_dtype)

    # N / K tile sizes, lane-dense (multiples of 128, large tiles are already
    # 256-aligned for the 2x(256x256) MXUs on v6e/v7x).
    tn_ = min(tn, _round_up(out_features, 128))
    tk_ = min(tk, _round_up(in_features, 128))
    n_pad = _round_up(out_features, tn_)
    k_pad = _round_up(in_features, tk_)
    kg = k_pad // tk_

    # --- hoisted, one-time weight prep (not in the per-call hot path) ---
    w_t = weight.T.astype(compute_dtype)          # (K, N): MXU-native RHS
    if (k_pad, n_pad) != (in_features, out_features):
        w_t = jnp.pad(w_t, ((0, k_pad - in_features), (0, n_pad - out_features)))
    b = jnp.zeros((out_features,), jnp.float32) if bias is None else bias
    b2d = b.astype(jnp.float32).reshape(1, out_features)
    if n_pad != out_features:
        b2d = jnp.pad(b2d, ((0, 0), (0, n_pad - out_features)))
    w_t = jax.device_put(w_t)
    b2d = jax.device_put(b2d)

    @jax.jit
    def forward(x):
        assert x.shape[-1] == in_features
        lead = x.shape[:-1]
        m = math.prod(lead) if lead else 1
        out_dtype = x.dtype
        if m == 0:
            return jnp.zeros((*lead, out_features), out_dtype)

        tm_ = min(tm, _round_up(m, sub))
        m_pad = _round_up(m, tm_)

        x2d = x.reshape(m, in_features).astype(compute_dtype)
        if (m_pad, k_pad) != (m, in_features):
            x2d = jnp.pad(x2d, ((0, m_pad - m), (0, k_pad - in_features)))

        mg, ng = m_pad // tm_, n_pad // tn_
        oitem = jnp.dtype(out_dtype).itemsize

        # VMEM footprint: double-buffered inputs/outputs (+ f32 scratch on the
        # K-split path), with headroom; stays below v7x's 64 MiB physical VMEM.
        vmem_bytes = (2 * (tm_ * tk_ + tk_ * tn_ + tn_) * citem
                      + 2 * tm_ * tn_ * oitem
                      + tm_ * tn_ * 4)
        vmem_limit = int(min(max(int(vmem_bytes * 1.5), 32 * 2**20), 56 * 2**20))

        if kg == 1:
            # --- weight-stationary path (typical Linear layer) ---
            out = pl.pallas_call(
                _linear_kernel_wstationary,
                out_shape=jax.ShapeDtypeStruct((m_pad, n_pad), out_dtype),
                grid_spec=pltpu.PrefetchScalarGridSpec(
                    num_scalar_prefetch=0,
                    grid=(ng, mg),                      # M innermost
                    in_specs=[
                        pl.BlockSpec((tm_, tk_), lambda j, i: (i, 0)),
                        # constant across the inner M loop -> W fetched once
                        # per N tile, stays VMEM-resident while x streams.
                        pl.BlockSpec((tk_, tn_), lambda j, i: (0, j)),
                        pl.BlockSpec((1, tn_), lambda j, i: (0, j)),
                    ],
                    out_specs=pl.BlockSpec((tm_, tn_), lambda j, i: (i, j)),
                ),
                compiler_params=pltpu.CompilerParams(
                    dimension_semantics=("parallel", "parallel"),
                    vmem_limit_bytes=vmem_limit,
                ),
                cost_estimate=pl.CostEstimate(
                    flops=2 * m_pad * k_pad * n_pad,
                    transcendentals=0,
                    bytes_accessed=(
                        ng * m_pad * k_pad * citem      # x read once per N tile
                        + k_pad * n_pad * citem         # W read once
                        + n_pad * 4                     # bias
                        + m_pad * n_pad * oitem         # output
                    ),
                ),
            )(x2d, w_t, b2d)
        else:
            # --- K-split path (large in_features) ---
            out = pl.pallas_call(
                _linear_kernel_ksplit,
                out_shape=jax.ShapeDtypeStruct((m_pad, n_pad), out_dtype),
                grid_spec=pltpu.PrefetchScalarGridSpec(
                    num_scalar_prefetch=0,
                    grid=(mg, ng, kg),                  # K innermost (reduction)
                    in_specs=[
                        pl.BlockSpec((tm_, tk_), lambda i, j, k: (i, k)),
                        pl.BlockSpec((tk_, tn_), lambda i, j, k: (k, j)),
                        pl.BlockSpec((1, tn_), lambda i, j, k: (0, j)),
                    ],
                    out_specs=pl.BlockSpec((tm_, tn_), lambda i, j, k: (i, j)),
                    scratch_shapes=[pltpu.VMEM((tm_, tn_), jnp.float32)],
                ),
                compiler_params=pltpu.CompilerParams(
                    dimension_semantics=("parallel", "parallel", "arbitrary"),
                    vmem_limit_bytes=vmem_limit,
                ),
                cost_estimate=pl.CostEstimate(
                    flops=2 * m_pad * k_pad * n_pad,
                    transcendentals=0,
                    bytes_accessed=(
                        ng * m_pad * k_pad * citem      # x re-read per N tile
                        + mg * k_pad * n_pad * citem    # W re-read per M tile
                        + n_pad * 4
                        + m_pad * n_pad * oitem
                    ),
                ),
            )(x2d, w_t, b2d)

        out = out[:m, :out_features]
        return out.reshape(*lead, out_features)

    return forward


def init_linear_net_params(key, in_features, out_features):
    """Xavier-uniform weight (out, in), zero bias — matches reset_parameters()."""
    bound = (6.0 / (in_features + out_features)) ** 0.5
    weight = jax.random.uniform(
        key, (out_features, in_features), dtype=jnp.float32,
        minval=-bound, maxval=bound)
    bias = jnp.zeros((out_features,), dtype=jnp.float32)
    return weight, bias


if __name__ == "__main__":
    in_features = 32
    out_features = 64
    batch, seq = 2, 8                 # input: (N, *, H_in) = (2, 8, 32)

    key = jax.random.PRNGKey(0)
    k_w, k_x = jax.random.split(key)

    weight, bias = init_linear_net_params(k_w, in_features, out_features)
    x = jax.random.normal(k_x, (batch, seq, in_features), dtype=jnp.float32)

    # TODO(synk): training-mode weight dropout (dropout>0) not implemented;
    # module default dropout=0.0 makes that branch a no-op for this forward.
    linear_net = make_linear_net(weight, bias)
    y = jax.block_until_ready(linear_net(x))

    assert y.shape == (batch, seq, out_features)
    assert y.dtype == x.dtype

    # Tight check against a reference computing the same bf16-rounded products
    # with f32 accumulation (what the MXU does).
    x_bf = x.astype(jnp.bfloat16).astype(jnp.float32)
    w_bf = weight.astype(jnp.bfloat16).astype(jnp.float32)
    y_ref_bf16 = x_bf @ w_bf.T + bias
    assert jnp.allclose(y, y_ref_bf16, atol=1e-4, rtol=1e-4)

    # Loose sanity check against the exact f32 module semantics.
    y_ref_f32 = x @ weight.T + bias
    assert jnp.allclose(y, y_ref_f32, atol=1e-1, rtol=1e-1)

    print("KERNEL_OK")
</pallas_src>

<mosaic_0001>
module attributes {stable_mosaic.version = 11 : i64} {
  func.func @_linear_kernel_wstationary(%arg0: i32, %arg1: i32, %arg2: memref<16x128xbf16, #tpu.memory_space<vmem>>, %arg3: memref<128x128xbf16, #tpu.memory_space<vmem>>, %arg4: memref<1x128xf32, #tpu.memory_space<vmem>>, %arg5: memref<16x128xf32, #tpu.memory_space<vmem>>) attributes {dimension_semantics = [#tpu.dimension_semantics<parallel>, #tpu.dimension_semantics<parallel>], iteration_bounds = array<i64: 1, 1>, scalar_prefetch = 0 : i64, scratch_operands = 0 : i64, tpu.core_type = #tpu.core_type<tc>, window_params = [{transform_indices = @transform_0, window_bounds = array<i64: 16, 128>}, {transform_indices = @transform_1, window_bounds = array<i64: 128, 128>}, {transform_indices = @transform_2, window_bounds = array<i64: 1, 128>}, {transform_indices = @transform_3, window_bounds = array<i64: 16, 128>}]} {
    %c0 = arith.constant 0 : index
    %c0_0 = arith.constant 0 : index
    %0 = vector.load %arg2[%c0, %c0_0] : memref<16x128xbf16, #tpu.memory_space<vmem>>, vector<16x128xbf16>
    %c0_1 = arith.constant 0 : index
    %c0_2 = arith.constant 0 : index
    %1 = vector.load %arg3[%c0_1, %c0_2] : memref<128x128xbf16, #tpu.memory_space<vmem>>, vector<128x128xbf16>
    %cst = arith.constant dense<0.000000e+00> : vector<16x128xf32>
    %2 = tpu.matmul %0, %1, %cst {dimension_numbers = #tpu.dot_dimension_numbers<[1], [0], [0], [1], [0, 0, 1, 1], [], []>} : vector<16x128xbf16>, vector<128x128xbf16>, vector<16x128xf32> -> vector<16x128xf32>
    %c0_3 = arith.constant 0 : index
    %c0_4 = arith.constant 0 : index
    %3 = vector.load %arg4[%c0_3, %c0_4] : memref<1x128xf32, #tpu.memory_space<vmem>>, vector<1x128xf32>
    %4 = vector.broadcast %3 : vector<1x128xf32> to vector<16x128xf32>
    %5 = arith.addf %2, %4 : vector<16x128xf32>
    %c0_5 = arith.constant 0 : index
    %c0_6 = arith.constant 0 : index
    %6 = vector.load %arg5[%c0_5, %c0_6] : memref<16x128xf32, #tpu.memory_space<vmem>>, vector<16x128xf32>
    tpu.vector_store %arg5[%c0_5, %c0_6], %5 {strides = array<i32>} : memref<16x128xf32, #tpu.memory_space<vmem>>, vector<16x128xf32>,
    return
  }
  func.func @transform_0(%arg0: i32, %arg1: i32) -> (i32, i32) {
    %c0_i32 = arith.constant 0 : i32
    %c0_i32_0 = arith.constant 0 : i32
    return %arg1, %c0_i32 : i32, i32
  }
  func.func @transform_1(%arg0: i32, %arg1: i32) -> (i32, i32) {
    %c0_i32 = arith.constant 0 : i32
    %c0_i32_0 = arith.constant 0 : i32
    return %c0_i32, %arg0 : i32, i32
  }
  func.func @transform_2(%arg0: i32, %arg1: i32) -> (i32, i32) {
    %c0_i32 = arith.constant 0 : i32
    %c0_i32_0 = arith.constant 0 : i32
    return %c0_i32, %arg0 : i32, i32
  }
  func.func @transform_3(%arg0: i32, %arg1: i32) -> (i32, i32) {
    %c0_i32 = arith.constant 0 : i32
    return %arg1, %arg0 : i32, i32
  }
}

</mosaic_0001>

<llo_original>
// kernel: forward.1
$region0: #{forward.1}
  #allocation0 [shape = 'u32[]', space=smem, size = 0x4, offset = 0x4, fixed_abs, tag = 'smem constant byte address 0x4 - core index']
  #allocation1 [shape = 'u32[72,128]{1,0:T(1,128)}', space=vmem, size = 0x9000, scoped, tag = 'internal scratch']
  %s0 = inlined_call_operand.vmem [shape: bf16[16,128], index: 0, kind: input, shape index: {}]
  %s1 = inlined_call_operand.hbm [shape: bf16[128,128], index: 1, kind: input, shape index: {}]
  %s2 = inlined_call_operand.vmem [shape: f32[1,128], index: 2, kind: input, shape index: {}]
  %s3 = inlined_call_operand.vmem [shape: f32[16,128], index: 3, kind: output, shape index: {}]
  %s4 = sld [smem:[#allocation0]]
  $region26: #{forward.1} parent=0
    _
  %s6 = ssub.s32 1, %s4
  %s7 = scalar_select 0, %s6, %s4
  $region1: #{forward.1} parent=0
    #allocation2 [shape = 'u8[32768]{0}', space=vmem, size = 0x8000, scoped, tag = 'input window, operand 1, single buffered']
    #allocation3 [shape = 's32[1]{0}', space=sflag, size = 0x4, scoped, tag = 'scoped memory for forward.1']
    %8 = vsyncpa [#allocation3], 0
    // Predicated region
    $region2: #{forward.1} parent=1 // pred_check
      _
    $region3: #{forward.1} parent=1 // pred_check_branch
      %10 = sbr.rel (0) target = $region5
    $region4: #{forward.1} parent=1 // pred_region
      _
    $region5: #{forward.1} parent=1 // pred_fallthru
      _
    // Predicated region
    $region6: #{forward.1} parent=1 // pred_check
      _
    $region7: #{forward.1} parent=1 // pred_check_branch
      %12 = sbr.rel (0) target = $region9
    $region8: #{forward.1} parent=1 // pred_region
      %14 = vsyncadd [#allocation3], 0
      %s15 = sshll.u32 %s1, 4
      %s16 = int_to_ptr.hbm [resolvable:$true] %s15
      %s17 = sshll.u32 [#allocation2], 4
      %s18 = int_to_ptr.vmem [resolvable:$true] %s17
      %23 = dma.hbm_to_vmem [thread:$0]  %s16, 1024, %s18, [#allocation3], 64, 64, 4
    $region9: #{forward.1} parent=1 // pred_fallthru
      _
    // Predicated region
    $region10: #{forward.1} parent=1 // pred_check
      _
    $region11: #{forward.1} parent=1 // pred_check_branch
      %25 = sbr.rel (0) target = $region13
    $region12: #{forward.1} parent=1 // pred_region
      _
    $region13: #{forward.1} parent=1 // pred_fallthru
      _
    // Predicated region
    $region14: #{forward.1} parent=1 // pred_check
      _
    $region15: #{forward.1} parent=1 // pred_check_branch
      %27 = sbr.rel (0) target = $region17
    $region16: #{forward.1} parent=1 // pred_region
      %29 = dma.done [#allocation3], 1024
    $region17: #{forward.1} parent=1 // pred_fallthru
      _
    %v30 = vld [vmem:[%s0] sm:$0xf]
    %v31 = vld [vmem:[%s0 + $0x4] sm:$0xf]
    %v32 = vld [vmem:[#allocation2] sm:$0xf]
    %v33 = vld [vmem:[#allocation2 + $0x4] sm:$0xf]
    %v34 = vld [vmem:[#allocation2 + $0x8] sm:$0xf]
    %v35 = vld [vmem:[#allocation2 + $0xc] sm:$0xf]
    %v36 = vld [vmem:[#allocation2 + $0x10] sm:$0xf]
    %v37 = vld [vmem:[#allocation2 + $0x14] sm:$0xf]
    %v38 = vld [vmem:[#allocation2 + $0x18] sm:$0xf]
    %v39 = vld [vmem:[#allocation2 + $0x1c] sm:$0xf]
    %v40 = vld [vmem:[#allocation2 + $0x20] sm:$0xf]
    %v41 = vld [vmem:[#allocation2 + $0x24] sm:$0xf]
    %v42 = vld [vmem:[#allocation2 + $0x28] sm:$0xf]
    %v43 = vld [vmem:[#allocation2 + $0x2c] sm:$0xf]
    %v44 = vld [vmem:[#allocation2 + $0x30] sm:$0xf]
    %v45 = vld [vmem:[#allocation2 + $0x34] sm:$0xf]
    %v46 = vld [vmem:[#allocation2 + $0x38] sm:$0xf]
    %v47 = vld [vmem:[#allocation2 + $0x3c] sm:$0xf]
    %v48 = vld [vmem:[%s2] sm:$0x1]
    %v50 = vperm.slane %v48, 0
    %v54 = vunpack.c.l.b16 %v30
    %v55 = vunpack.c.l.b16 %v31
    %v56 = vpack.c.b16 %v55, %v54
    %v74 = vunpack.c.l.b16 %v32
    %v75 = vunpack.c.l.b16 %v33
    %v76 = vunpack.c.l.b16 %v34
    %v77 = vunpack.c.l.b16 %v35
    %v78 = vunpack.c.l.b16 %v36
    %v79 = vunpack.c.l.b16 %v37
    %v80 = vunpack.c.l.b16 %v38
    %v81 = vunpack.c.l.b16 %v39
    %v82 = vunpack.c.l.b16 %v40
    %v83 = vunpack.c.l.b16 %v41
    %v84 = vunpack.c.l.b16 %v42
    %v85 = vunpack.c.l.b16 %v43
    %v86 = vunpack.c.l.b16 %v44
    %v87 = vunpack.c.l.b16 %v45
    %v88 = vunpack.c.l.b16 %v46
    %v89 = vunpack.c.l.b16 %v47
    %v90 = vpack.c.b16 %v75, %v74
    %v91 = vpack.c.b16 %v77, %v76
    %v92 = vpack.c.b16 %v79, %v78
    %v93 = vpack.c.b16 %v81, %v80
    %v94 = vpack.c.b16 %v83, %v82
    %v95 = vpack.c.b16 %v85, %v84
    %v96 = vpack.c.b16 %v87, %v86
    %v97 = vpack.c.b16 %v89, %v88
    %106 = vmatpush.bf16.msra.mxu0 %v97
    %107 = vmatpush.bf16.msra.mxu0 %v96
    %108 = vmatpush.bf16.msra.mxu0 %v95
    %109 = vmatpush.bf16.msra.mxu0 %v94
    %110 = vmatpush.bf16.msra.mxu0 %v93
    %111 = vmatpush.bf16.msra.mxu0 %v92
    %112 = vmatpush.bf16.msra.mxu0 %v91
    %113 = vmatpush.bf16.msra.mxu0 %v90
    %114 = vmatmul.bf16.gmra.mxu0 %v56
    %v115 = vpop.f32.mrf.mxu0
    %v116 = vadd.f32 %v50, %v115
    %v117 = vpop.f32.mrf.mxu0
    %v118 = vadd.f32 %v50, %v117
    %119 = vdwg.mxu0
    %120 = vst [vmem:[%s3] sm:$0xff] %v116
    %121 = vst [vmem:[%s3 + $0x8] sm:$0xff] %v118
    // Predicated region
    $region18: #{forward.1} parent=1 // pred_check
      _
    $region19: #{forward.1} parent=1 // pred_check_branch
      %123 = sbr.rel (0) target = $region21
    $region20: #{forward.1} parent=1 // pred_region
      _
    $region21: #{forward.1} parent=1 // pred_fallthru
      _
    // Predicated region
    $region22: #{forward.1} parent=1 // pred_check
      _
    $region23: #{forward.1} parent=1 // pred_check_branch
      %125 = sbr.rel (0) target = $region25
    $region24: #{forward.1} parent=1 // pred_region
      _
    $region25: #{forward.1} parent=1 // pred_fallthru
      _
    %126 = vsyncpa [#allocation3], 1

</llo_original>
